<compile_context>
chip_gen: v5e
topology: v5e:2x2
jax: 0.10.0
libtpu: 0.0.40
codegen_flags: <defaults>
</compile_context>

<pallas_src>
import functools
import math

import jax
import jax.numpy as jnp
from jax.experimental import pallas as pl
from jax.experimental.pallas import tpu as pltpu


def _round_up(n, m):
    return ((n + m - 1) // m) * m


def _param_offsets(S, H):
    """Static row offsets of W1^T, W2^T, b1, b2 inside the packed [rows, H] buffer."""
    off_w1t = 0                                   # W1^T : [H, S]
    off_w2t = _round_up(off_w1t + H, 8)           # W2^T : [S, H]
    off_b1 = _round_up(off_w2t + S, 8)            # b1   : [H, 1]
    off_b2 = _round_up(off_b1 + H, 8)             # b2   : [S, 1]
    rows = _round_up(off_b2 + S, 8)
    return (off_w1t, off_w2t, off_b1, off_b2), rows


def pack_params(w1, b1, w2, b2):
    """Pack parameters (pre-transposed for lane-dense compute).  Do this ONCE.

    w1: [S, H], b1: [1, H], w2: [H, S], b2: [1, S]  ->  packed [rows, H].
    """
    S, H = w1.shape
    assert w2.shape == (H, S) and b1.shape == (1, H) and b2.shape == (1, S)
    (off_w1t, off_w2t, off_b1, off_b2), rows = _param_offsets(S, H)
    buf = jnp.zeros((rows, H), dtype=w1.dtype)
    buf = buf.at[off_w1t:off_w1t + H, :S].set(w1.T)
    buf = buf.at[off_w2t:off_w2t + S, :H].set(w2.T)
    buf = buf.at[off_b1:off_b1 + H, :1].set(b1.reshape(H, 1))
    buf = buf.at[off_b2:off_b2 + S, :1].set(b2.reshape(S, 1))
    return buf


def _mlp_kernel_t(x_ref, p_ref, o_ref, *, S, H, offs):
    """Transposed MLP tile: x_ref [S, Bt] -> o_ref [S, Bt] (batch on lanes)."""
    off_w1t, off_w2t, off_b1, off_b2 = offs
    # Static, aligned single slices of the packed parameter tile.
    w1t = p_ref[off_w1t:off_w1t + H, :S]        # [H, S]
    w2t = p_ref[off_w2t:off_w2t + S, :H]        # [S, H]
    b1 = p_ref[off_b1:off_b1 + H, :1]           # [H, 1]
    b2 = p_ref[off_b2:off_b2 + S, :1]           # [S, 1]

    xt = x_ref[...]                              # [S, Bt]
    h = jnp.dot(w1t, xt, preferred_element_type=jnp.float32) + b1   # [H, Bt]
    h = jnp.maximum(h, 0.0)                      # ReLU on the VPU (f32)
    y = jnp.dot(w2t, h, preferred_element_type=jnp.float32) + b2    # [S, Bt]
    o_ref[...] = jnp.tanh(y).astype(o_ref.dtype)                    # Tanh on the EUP


def fb_index_offsets(x, packed, *, batch_tile=2048):
    """Forward pass: x [..., S] -> [..., S], with packed params from pack_params()."""
    S = x.shape[-1]
    H = packed.shape[1]
    offs, _ = _param_offsets(S, H)

    lead = x.shape[:-1]
    B = int(math.prod(lead)) if lead else 1
    x2 = x.reshape(B, S)

    # Lane-dense tile: multiple of 128, at most `batch_tile`, capped near B/2 so
    # modest batches still give >= 2 grid steps (v7x megacore).  If the tile
    # would cover the whole batch, use the exact batch (whole-array block is
    # always a legal block shape and avoids any padding).
    bt = max(128, min(batch_tile, _round_up(pl.cdiv(B, 2), 128)))
    if bt >= B:
        bt = B
    grid = (pl.cdiv(B, bt),)

    xt = x2.T  # [S, B] — layout plumbing so batch sits on the 128-lane axis.
    kernel = functools.partial(_mlp_kernel_t, S=S, H=H, offs=offs)

    yt = pl.pallas_call(
        kernel,
        out_shape=jax.ShapeDtypeStruct((S, B), x.dtype),
        grid=grid,
        in_specs=[
            # Activations: lane-dense batch tiles, pipelined across the grid.
            pl.BlockSpec((S, bt), lambda i: (0, i)),
            # Packed params: constant index_map -> stays VMEM-resident.
            pl.BlockSpec(packed.shape, lambda i: (0, 0)),
        ],
        out_specs=pl.BlockSpec((S, bt), lambda i: (0, i)),
        compiler_params=pltpu.CompilerParams(
            dimension_semantics=("parallel",)),
    )(xt, packed)

    return yt.T.reshape(*lead, S)


def init_params(key, stage_num, dtype=jnp.float32):
    """PyTorch-Linear-style init: U(-1/sqrt(fan_in), 1/sqrt(fan_in)).

    Weights returned as [in, out] (w1: [S, 2S], w2: [2S, S]).
    """
    S, H = stage_num, 2 * stage_num
    k1, k2, k3, k4 = jax.random.split(key, 4)
    lim1 = 1.0 / jnp.sqrt(jnp.asarray(S, dtype))
    lim2 = 1.0 / jnp.sqrt(jnp.asarray(H, dtype))
    w1 = jax.random.uniform(k1, (S, H), dtype, -lim1, lim1)
    b1 = jax.random.uniform(k2, (1, H), dtype, -lim1, lim1)
    w2 = jax.random.uniform(k3, (H, S), dtype, -lim2, lim2)
    b2 = jax.random.uniform(k4, (1, S), dtype, -lim2, lim2)
    return w1, b1, w2, b2


def _reference(x, w1, b1, w2, b2):
    h = jnp.maximum(x @ w1 + b1, 0.0)
    return jnp.tanh(h @ w2 + b2)


if __name__ == "__main__":
    stage_num = 8

    key = jax.random.PRNGKey(0)
    kx, kp, kx2 = jax.random.split(key, 3)
    w1, b1, w2, b2 = init_params(kp, stage_num)

    # Pack ONCE (hoisted out of the per-call path).
    packed = pack_params(w1, b1, w2, b2)

    # Small batch: single whole-array block, one invocation.
    x = jax.random.normal(kx, (8, stage_num), jnp.float32)
    out = jax.block_until_ready(fb_index_offsets(x, packed))
    ref = _reference(x, w1, b1, w2, b2)
    assert out.shape == (8, stage_num)
    assert jnp.allclose(out, ref, atol=1e-5, rtol=1e-5), "small-path mismatch"

    # Larger, non-multiple batch: >=2 lane-dense grid steps, padded last tile.
    xb = jax.random.normal(kx2, (1000, stage_num), jnp.float32)
    outb = jax.block_until_ready(fb_index_offsets(xb, packed))
    refb = _reference(xb, w1, b1, w2, b2)
    assert outb.shape == (1000, stage_num)
    assert jnp.allclose(outb, refb, atol=1e-5, rtol=1e-5), "batched-path mismatch"

    print("KERNEL_OK")
</pallas_src>

<mosaic_0001>
module attributes {stable_mosaic.version = 11 : i64} {
  func.func @_mlp_kernel_t(%arg0: i32, %arg1: memref<8x8xf32, #tpu.memory_space<vmem>>, %arg2: memref<48x16xf32, #tpu.memory_space<vmem>>, %arg3: memref<8x8xf32, #tpu.memory_space<vmem>>) attributes {dimension_semantics = [#tpu.dimension_semantics<parallel>], iteration_bounds = array<i64: 1>, scalar_prefetch = 0 : i64, scratch_operands = 0 : i64, tpu.core_type = #tpu.core_type<tc>, window_params = [{transform_indices = @transform_0, window_bounds = array<i64: 8, 8>}, {pipeline_mode = #tpu.pipeline_mode<synchronous>, transform_indices = @transform_1, window_bounds = array<i64: 48, 16>}, {transform_indices = @transform_2, window_bounds = array<i64: 8, 8>}]} {
    %c0 = arith.constant 0 : index
    %c0_0 = arith.constant 0 : index
    %0 = vector.load %arg2[%c0, %c0_0] : memref<48x16xf32, #tpu.memory_space<vmem>>, vector<16x8xf32>
    %c16 = arith.constant 16 : index
    %c0_1 = arith.constant 0 : index
    %1 = vector.load %arg2[%c16, %c0_1] : memref<48x16xf32, #tpu.memory_space<vmem>>, vector<8x16xf32>
    %c24 = arith.constant 24 : index
    %c0_2 = arith.constant 0 : index
    %2 = vector.load %arg2[%c24, %c0_2] : memref<48x16xf32, #tpu.memory_space<vmem>>, vector<16x1xf32>
    %c40 = arith.constant 40 : index
    %c0_3 = arith.constant 0 : index
    %3 = vector.load %arg2[%c40, %c0_3] : memref<48x16xf32, #tpu.memory_space<vmem>>, vector<8x1xf32>
    %c0_4 = arith.constant 0 : index
    %c0_5 = arith.constant 0 : index
    %4 = vector.load %arg1[%c0_4, %c0_5] : memref<8x8xf32, #tpu.memory_space<vmem>>, vector<8x8xf32>
    %cst = arith.constant dense<0.000000e+00> : vector<16x8xf32>
    %5 = tpu.matmul %0, %4, %cst {dimension_numbers = #tpu.dot_dimension_numbers<[1], [0], [0], [1], [0, 0, 1, 1], [], []>} : vector<16x8xf32>, vector<8x8xf32>, vector<16x8xf32> -> vector<16x8xf32>
    %6 = vector.broadcast %2 : vector<16x1xf32> to vector<16x8xf32>
    %7 = arith.addf %5, %6 : vector<16x8xf32>
    %cst_6 = arith.constant 0.000000e+00 : f32
    %8 = vector.broadcast %cst_6 : f32 to vector<16x8xf32>
    %9 = arith.maximumf %7, %8 : vector<16x8xf32>
    %cst_7 = arith.constant dense<0.000000e+00> : vector<8x8xf32>
    %10 = tpu.matmul %1, %9, %cst_7 {dimension_numbers = #tpu.dot_dimension_numbers<[1], [0], [0], [1], [0, 0, 1, 1], [], []>} : vector<8x16xf32>, vector<16x8xf32>, vector<8x8xf32> -> vector<8x8xf32>
    %11 = vector.broadcast %3 : vector<8x1xf32> to vector<8x8xf32>
    %12 = arith.addf %10, %11 : vector<8x8xf32>
    %13 = math.tanh %12 : vector<8x8xf32>
    %c0_8 = arith.constant 0 : index
    %c0_9 = arith.constant 0 : index
    %14 = vector.load %arg3[%c0_8, %c0_9] : memref<8x8xf32, #tpu.memory_space<vmem>>, vector<8x8xf32>
    tpu.vector_store %arg3[%c0_8, %c0_9], %13 {strides = array<i32>} : memref<8x8xf32, #tpu.memory_space<vmem>>, vector<8x8xf32>,
    return
  }
  func.func @transform_0(%arg0: i32) -> (i32, i32) {
    %c0_i32 = arith.constant 0 : i32
    %c0_i32_0 = arith.constant 0 : i32
    return %c0_i32, %arg0 : i32, i32
  }
  func.func @transform_1(%arg0: i32) -> (i32, i32) {
    %c0_i32 = arith.constant 0 : i32
    %c0_i32_0 = arith.constant 0 : i32
    %c0_i32_1 = arith.constant 0 : i32
    return %c0_i32, %c0_i32_0 : i32, i32
  }
  func.func @transform_2(%arg0: i32) -> (i32, i32) {
    %c0_i32 = arith.constant 0 : i32
    %c0_i32_0 = arith.constant 0 : i32
    return %c0_i32, %arg0 : i32, i32
  }
}

</mosaic_0001>

<llo_original>
// kernel: tpu_custom_call.1
$region0: #{tpu_custom_call.1}
  #allocation0 [shape = 'u32[]', space=smem, size = 0x4, offset = 0x4, fixed_abs, tag = 'smem constant byte address 0x4 - core index']
  #allocation1 [shape = 'u32[72,128]{1,0:T(1,128)}', space=vmem, size = 0x9000, scoped, tag = 'internal scratch']
  %s0 = inlined_call_operand.vmem [shape: f32[8,8], index: 0, kind: input, shape index: {}]
  %s1 = inlined_call_operand.vmem [shape: f32[48,16], index: 1, kind: input, shape index: {}]
  %s2 = inlined_call_operand.hbm [shape: f32[8,8], index: 2, kind: output, shape index: {}]
  %s3 = sld [smem:[#allocation0]]
  $region18: #{tpu_custom_call.1} parent=0
    _
  %s5 = ssub.s32 1, %s3
  %s6 = scalar_select 0, %s5, %s3
  $region1: #{tpu_custom_call.1} parent=0
    #allocation2 [shape = 'u8[4096]{0}', space=vmem, size = 0x1000, scoped, tag = 'output window, operand 0, single buffered']
    #allocation3 [shape = 's32[1]{0}', space=sflag, size = 0x4, scoped, tag = 'scoped memory for tpu_custom_call.1']
    %7 = vsyncpa [#allocation3], 0
    // Predicated region
    $region2: #{tpu_custom_call.1} parent=1 // pred_check
      _
    $region3: #{tpu_custom_call.1} parent=1 // pred_check_branch
      %9 = sbr.rel (0) target = $region5
    $region4: #{tpu_custom_call.1} parent=1 // pred_region
      _
    $region5: #{tpu_custom_call.1} parent=1 // pred_fallthru
      _
    // Predicated region
    $region6: #{tpu_custom_call.1} parent=1 // pred_check
      _
    $region7: #{tpu_custom_call.1} parent=1 // pred_check_branch
      %11 = sbr.rel (0) target = $region9
    $region8: #{tpu_custom_call.1} parent=1 // pred_region
      _
    $region9: #{tpu_custom_call.1} parent=1 // pred_fallthru
      _
    %v12 = vld [vmem:[%s1] sm:$0xff]
    %v13 = vld [vmem:[%s1 + $0x8] sm:$0xff]
    %v14 = vld [vmem:[%s1 + $0x10] sm:$0xff]
    %v15 = vld [vmem:[%s1 + $0x18] sm:$0xff]
    %v16 = vld [vmem:[%s1 + $0x20] sm:$0xff]
    %v17 = vld [vmem:[%s1 + $0x28] sm:$0xff]
    %v18 = vld [vmem:[%s0] sm:$0xff]
    %20 = vset.pattern.permute.xlu0 0
    %21 = vperm.xlu0 %20, %v15
    %v22 = vpop.permute.xlu0 %21
    %25 = vset.pattern.permute.xlu0 0
    %26 = vperm.xlu0 %25, %v16
    %v27 = vpop.permute.xlu0 %26
    %vm29 = vcmask 64512
    %v31 = vsel %vm29, %v12, 0
    %v34 = vsel %vm29, %v13, 0
    %36 = vmatpush.msra.mxu0 0.0
    %37 = vmatpush.msra.mxu0 0.0
    %38 = vmatpush.msra.mxu0 0.0
    %39 = vmatpush.msra.mxu0 0.0
    %40 = vmatpush.msra.mxu0 0.0
    %41 = vmatpush.msra.mxu0 0.0
    %42 = vmatpush.msra.mxu0 0.0
    %43 = vmatpush.msra.mxu0 0.0
    %44 = vmatpush.msra.mxu0 0.0
    %45 = vmatpush.msra.mxu0 0.0
    %46 = vmatpush.msra.mxu0 0.0
    %47 = vmatpush.msra.mxu0 0.0
    %48 = vmatpush.msra.mxu0 0.0
    %49 = vmatpush.msra.mxu0 0.0
    %50 = vmatpush.msra.mxu0 0.0
    %51 = vmatpush.msra.mxu0 %v18
    %52 = vmatmul.f32.gmra.mxu0 %v31
    %v53 = vpop.f32.mrf.mxu0
    %v54 = vadd.f32 %v22, %v53
    %55 = vmatmul.f32.gmra.mxu0 %v34
    %v56 = vpop.f32.mrf.mxu0
    %v57 = vadd.f32 %v27, %v56
    %58 = vdwg.mxu0
    %v59 = vmax.f32 %v54, 0.0
    %v60 = vmax.f32 %v57, 0.0
    %62 = vset.pattern.permute.xlu0 0
    %63 = vperm.xlu0 %62, %v17
    %v64 = vpop.permute.xlu0 %63
    %vm66 = vcmask 130048
    %v68 = vsel %vm66, %v14, 0
    %70 = vmatpush.msra.mxu0 0.0
    %71 = vmatpush.msra.mxu0 0.0
    %72 = vmatpush.msra.mxu0 0.0
    %73 = vmatpush.msra.mxu0 0.0
    %74 = vmatpush.msra.mxu0 0.0
    %75 = vmatpush.msra.mxu0 0.0
    %76 = vmatpush.msra.mxu0 0.0
    %77 = vmatpush.msra.mxu0 0.0
    %78 = vmatpush.msra.mxu0 0.0
    %79 = vmatpush.msra.mxu0 0.0
    %80 = vmatpush.msra.mxu0 0.0
    %81 = vmatpush.msra.mxu0 0.0
    %82 = vmatpush.msra.mxu0 0.0
    %83 = vmatpush.msra.mxu0 0.0
    %84 = vmatpush.msra.mxu0 %v60
    %85 = vmatpush.msra.mxu0 %v59
    %86 = vmatmul.f32.gmra.mxu0 %v68
    %v87 = vpop.f32.mrf.mxu0
    %v88 = vadd.f32 %v64, %v87
    %89 = vdwg.mxu0
    %v90 = vtanh.pop %v88
    %91 = vst.msk [vmem:[#allocation2] sm:$0xff] %vm29, %v90
    // Predicated region
    $region10: #{tpu_custom_call.1} parent=1 // pred_check
      _
    $region11: #{tpu_custom_call.1} parent=1 // pred_check_branch
      %93 = sbr.rel (0) target = $region13
    $region12: #{tpu_custom_call.1} parent=1 // pred_region
      %95 = vsyncadd [#allocation3], 0
      %s97 = sshll.u32 [#allocation2], 4
      %s98 = int_to_ptr.vmem [resolvable:$true] %s97
      %s99 = sshll.u32 %s2, 4
      %s100 = int_to_ptr.hbm [resolvable:$true] %s99
      %102 = dma.vmem_to_hbm [thread:$0]  %s98, 128, %s100, [#allocation3]
    $region13: #{tpu_custom_call.1} parent=1 // pred_fallthru
      _
    // Predicated region
    $region14: #{tpu_custom_call.1} parent=1 // pred_check
      _
    $region15: #{tpu_custom_call.1} parent=1 // pred_check_branch
      %104 = sbr.rel (0) target = $region17
    $region16: #{tpu_custom_call.1} parent=1 // pred_region
      %106 = dma.done [#allocation3], 128
    $region17: #{tpu_custom_call.1} parent=1 // pred_fallthru
      _
    %107 = vsyncpa [#allocation3], 1

</llo_original>
